<compile_context>
chip_gen: v7x
topology: tpu7x:2x2x1
jax: 0.10.0
libtpu: 0.0.40
codegen_flags: <defaults>
</compile_context>

<pallas_src>
import jax
import jax.numpy as jnp
from jax.experimental import pallas as pl
from jax.experimental.pallas import tpu as pltpu

_PAIRWISE_EPS = 1e-6  # torch.nn.functional.pairwise_distance default eps


def batch_hard_loss(anchor, positive, negative, margin, *, block_rows=None,
                    target_tile_bytes=8 * 1024 * 1024):
    """Pallas implementation of BatchHardLoss.forward.

    anchor/positive/negative: (B, D) float arrays (f32 or bf16; cast to f32
    inside the kernel so bf16 inputs halve HBM traffic).
    margin: python float or scalar.
    Returns a scalar float32 loss.
    """
    B, D = anchor.shape
    itemsize = jnp.dtype(anchor.dtype).itemsize
    # Sublane alignment: 8 rows for 32-bit, 16 for bf16, 32 for 8-bit.
    row_align = max(8, 32 // itemsize)

    # --- choose batch tile size TB -------------------------------------------
    if block_rows is None:
        # 3 inputs x 2 pipeline buffers per block must fit the budget.
        max_rows = max(row_align, target_tile_bytes // (6 * D * itemsize))
        block_rows = int(max_rows)
    TB = int(block_rows)
    if TB >= B:
        TB = B                                  # single-block rows == full dim: always legal
    else:
        TB = max(row_align, (TB // row_align) * row_align)

    NB = pl.cdiv(B, TB)                         # number of batch blocks
    P = 2 if (NB % 2 == 0 and NB >= 2) else 1   # split across TCs when it divides evenly
    steps = NB // P
    needs_mask = (B % TB) != 0                  # last block partially out of bounds

    # --- kernel ---------------------------------------------------------------
    def kernel(a_ref, p_ref, n_ref, max_out, min_out, max_sc, min_sc):
        pi = pl.program_id(0)          # parallel (per-core) slice
        si = pl.program_id(1)          # sequential reduction step

        @pl.when(si == 0)
        def _init():
            max_sc[...] = jnp.full_like(max_sc, -jnp.inf)
            min_sc[...] = jnp.full_like(min_sc, jnp.inf)

        a = a_ref[...].astype(jnp.float32)
        p = p_ref[...].astype(jnp.float32)
        n = n_ref[...].astype(jnp.float32)

        # torch.pairwise_distance: ||x1 - x2 + eps||_2 along the last dim.
        dp = a - p + _PAIRWISE_EPS
        dn = a - n + _PAIRWISE_EPS
        dist_pos = jnp.sqrt(jnp.sum(dp * dp, axis=-1, keepdims=True))  # (TB, 1)
        dist_neg = jnp.sqrt(jnp.sum(dn * dn, axis=-1, keepdims=True))  # (TB, 1)

        if needs_mask:
            # Rows past the end of the batch in the (padded) last block must not
            # corrupt the reductions.
            block_start = (pi * steps + si) * TB
            rows = jax.lax.broadcasted_iota(jnp.int32, (TB, 1), 0)
            valid = rows < (B - block_start)
            dist_pos = jnp.where(valid, dist_pos, -jnp.inf)
            dist_neg = jnp.where(valid, dist_neg, jnp.inf)

        max_sc[...] = jnp.maximum(max_sc[...], jnp.max(dist_pos))
        min_sc[...] = jnp.minimum(min_sc[...], jnp.min(dist_neg))

        @pl.when(si == steps - 1)
        def _finalize():
            max_out[...] = jnp.broadcast_to(max_sc[...], max_out.shape)
            min_out[...] = jnp.broadcast_to(min_sc[...], min_out.shape)

    in_spec = pl.BlockSpec((TB, D), lambda pi, si: (pi * steps + si, 0))
    out_spec = pl.BlockSpec((8, 128), lambda pi, si: (pi, 0))   # lane-dense per-core partial

    max_parts, min_parts = pl.pallas_call(
        kernel,
        out_shape=(
            jax.ShapeDtypeStruct((8 * P, 128), jnp.float32),
            jax.ShapeDtypeStruct((8 * P, 128), jnp.float32),
        ),
        grid=(P, steps),
        in_specs=[in_spec, in_spec, in_spec],
        out_specs=(out_spec, out_spec),
        scratch_shapes=[
            pltpu.VMEM((1, 1), jnp.float32),
            pltpu.VMEM((1, 1), jnp.float32),
        ],
        compiler_params=pltpu.CompilerParams(
            dimension_semantics=("parallel", "arbitrary"),
            vmem_limit_bytes=32 * 1024 * 1024,
        ),
    )(anchor, positive, negative)

    hardest_positive = jnp.max(max_parts)
    hardest_negative = jnp.min(min_parts)
    return jnp.maximum(hardest_positive - hardest_negative + jnp.float32(margin), 0.0)


def _reference(anchor, positive, negative, margin):
    a = anchor.astype(jnp.float32)
    p = positive.astype(jnp.float32)
    n = negative.astype(jnp.float32)
    dp = jnp.sqrt(jnp.sum((a - p + _PAIRWISE_EPS) ** 2, axis=-1))
    dn = jnp.sqrt(jnp.sum((a - n + _PAIRWISE_EPS) ** 2, axis=-1))
    return jnp.maximum(jnp.max(dp) - jnp.min(dn) + margin, 0.0)


if __name__ == "__main__":
    key = jax.random.PRNGKey(0)

    # --- test 1: tiny shape implied by the module (single block path) --------
    k_a, k_p, k_n = jax.random.split(key, 3)
    B, D = 8, 32
    anchor = jax.random.normal(k_a, (B, D), dtype=jnp.float32)
    positive = jax.random.normal(k_p, (B, D), dtype=jnp.float32)
    negative = jax.random.normal(k_n, (B, D), dtype=jnp.float32)
    margin = 0.5

    loss = batch_hard_loss(anchor, positive, negative, margin)
    jax.block_until_ready(loss)
    ref = _reference(anchor, positive, negative, margin)
    assert jnp.allclose(loss, ref, atol=1e-5, rtol=1e-5), (loss, ref)

    # --- test 2: tiled path with a partial last block (masking exercised) ----
    k_a2, k_p2, k_n2 = jax.random.split(jax.random.PRNGKey(1), 3)
    B2, D2 = 20, 128
    a2 = jax.random.normal(k_a2, (B2, D2), dtype=jnp.float32)
    p2 = jax.random.normal(k_p2, (B2, D2), dtype=jnp.float32)
    n2 = jax.random.normal(k_n2, (B2, D2), dtype=jnp.float32)
    loss2 = batch_hard_loss(a2, p2, n2, margin, block_rows=8)
    jax.block_until_ready(loss2)
    ref2 = _reference(a2, p2, n2, margin)
    assert jnp.allclose(loss2, ref2, atol=1e-5, rtol=1e-5), (loss2, ref2)

    # --- test 3: even block count -> 2-way 'parallel' split + combine --------
    k_a3, k_p3, k_n3 = jax.random.split(jax.random.PRNGKey(2), 3)
    B3, D3 = 32, 128
    a3 = jax.random.normal(k_a3, (B3, D3), dtype=jnp.float32)
    p3 = jax.random.normal(k_p3, (B3, D3), dtype=jnp.float32)
    n3 = jax.random.normal(k_n3, (B3, D3), dtype=jnp.float32)
    loss3 = batch_hard_loss(a3, p3, n3, margin, block_rows=8)
    jax.block_until_ready(loss3)
    ref3 = _reference(a3, p3, n3, margin)
    assert jnp.allclose(loss3, ref3, atol=1e-5, rtol=1e-5), (loss3, ref3)

    print("KERNEL_OK")
</pallas_src>

<mosaic_0001>
module attributes {stable_mosaic.version = 11 : i64} {
  func.func @kernel(%arg0: i32, %arg1: i32, %arg2: memref<8x32xf32, #tpu.memory_space<vmem>>, %arg3: memref<8x32xf32, #tpu.memory_space<vmem>>, %arg4: memref<8x32xf32, #tpu.memory_space<vmem>>, %arg5: memref<8x128xf32, #tpu.memory_space<vmem>>, %arg6: memref<8x128xf32, #tpu.memory_space<vmem>>, %arg7: memref<1x1xf32, #tpu.memory_space<vmem>>, %arg8: memref<1x1xf32, #tpu.memory_space<vmem>>) attributes {dimension_semantics = [#tpu.dimension_semantics<parallel>, #tpu.dimension_semantics<arbitrary>], iteration_bounds = array<i64: 1, 1>, scalar_prefetch = 0 : i64, scratch_operands = 2 : i64, tpu.core_type = #tpu.core_type<tc>, window_params = [{transform_indices = @transform_0, window_bounds = array<i64: 8, 32>}, {transform_indices = @transform_1, window_bounds = array<i64: 8, 32>}, {transform_indices = @transform_2, window_bounds = array<i64: 8, 32>}, {transform_indices = @transform_3, window_bounds = array<i64: 8, 128>}, {transform_indices = @transform_4, window_bounds = array<i64: 8, 128>}]} {
    %c0_i32 = arith.constant 0 : i32
    %0 = arith.cmpi eq, %arg1, %c0_i32 : i32
    %1 = arith.extui %0 : i1 to i32
    %c0_i32_0 = arith.constant 0 : i32
    %2 = arith.cmpi ne, %1, %c0_i32_0 : i32
    scf.if %2 {
      %cst_21 = arith.constant 0xFF800000 : f32
      %39 = vector.broadcast %cst_21 : f32 to vector<1x1xf32>
      %c0_22 = arith.constant 0 : index
      %c0_23 = arith.constant 0 : index
      %40 = vector.load %arg7[%c0_22, %c0_23] : memref<1x1xf32, #tpu.memory_space<vmem>>, vector<1x1xf32>
      tpu.vector_store %arg7[%c0_22, %c0_23], %39 {strides = array<i32>} : memref<1x1xf32, #tpu.memory_space<vmem>>, vector<1x1xf32>,
      %cst_24 = arith.constant 0x7F800000 : f32
      %41 = vector.broadcast %cst_24 : f32 to vector<1x1xf32>
      %c0_25 = arith.constant 0 : index
      %c0_26 = arith.constant 0 : index
      %42 = vector.load %arg8[%c0_25, %c0_26] : memref<1x1xf32, #tpu.memory_space<vmem>>, vector<1x1xf32>
      tpu.vector_store %arg8[%c0_25, %c0_26], %41 {strides = array<i32>} : memref<1x1xf32, #tpu.memory_space<vmem>>, vector<1x1xf32>,
    } else {
    }
    %c0 = arith.constant 0 : index
    %c0_1 = arith.constant 0 : index
    %3 = vector.load %arg2[%c0, %c0_1] : memref<8x32xf32, #tpu.memory_space<vmem>>, vector<8x32xf32>
    %c0_2 = arith.constant 0 : index
    %c0_3 = arith.constant 0 : index
    %4 = vector.load %arg3[%c0_2, %c0_3] : memref<8x32xf32, #tpu.memory_space<vmem>>, vector<8x32xf32>
    %c0_4 = arith.constant 0 : index
    %c0_5 = arith.constant 0 : index
    %5 = vector.load %arg4[%c0_4, %c0_5] : memref<8x32xf32, #tpu.memory_space<vmem>>, vector<8x32xf32>
    %6 = arith.subf %3, %4 : vector<8x32xf32>
    %cst = arith.constant 9.99999997E-7 : f32
    %7 = vector.broadcast %cst : f32 to vector<8x32xf32>
    %8 = arith.addf %6, %7 : vector<8x32xf32>
    %9 = arith.subf %3, %5 : vector<8x32xf32>
    %cst_6 = arith.constant 9.99999997E-7 : f32
    %10 = vector.broadcast %cst_6 : f32 to vector<8x32xf32>
    %11 = arith.addf %9, %10 : vector<8x32xf32>
    %12 = arith.mulf %8, %8 : vector<8x32xf32>
    %cst_7 = arith.constant dense<0.000000e+00> : vector<8xf32>
    %13 = vector.multi_reduction <add>, %12, %cst_7 [1] : vector<8x32xf32> to vector<8xf32>
    %14 = vector.shape_cast %13 : vector<8xf32> to vector<8x1xf32>
    %15 = math.sqrt %14 : vector<8x1xf32>
    %16 = arith.mulf %11, %11 : vector<8x32xf32>
    %cst_8 = arith.constant dense<0.000000e+00> : vector<8xf32>
    %17 = vector.multi_reduction <add>, %16, %cst_8 [1] : vector<8x32xf32> to vector<8xf32>
    %18 = vector.shape_cast %17 : vector<8xf32> to vector<8x1xf32>
    %19 = math.sqrt %18 : vector<8x1xf32>
    %c0_9 = arith.constant 0 : index
    %c0_10 = arith.constant 0 : index
    %20 = vector.load %arg7[%c0_9, %c0_10] : memref<1x1xf32, #tpu.memory_space<vmem>>, vector<1x1xf32>
    %21 = vector.shape_cast %15 : vector<8x1xf32> to vector<1x8x1xf32>
    %cst_11 = arith.constant dense<0xFF800000> : vector<1xf32>
    %22 = vector.multi_reduction <maximumf>, %21, %cst_11 [1, 2] : vector<1x8x1xf32> to vector<1xf32>
    %23 = vector.shape_cast %22 : vector<1xf32> to vector<1x1x1xf32>
    %24 = vector.extract %23[0, 0, 0] : f32 from vector<1x1x1xf32>
    %25 = vector.broadcast %24 : f32 to vector<1x1xf32>
    %26 = arith.maximumf %20, %25 : vector<1x1xf32>
    %c0_12 = arith.constant 0 : index
    %c0_13 = arith.constant 0 : index
    %27 = vector.load %arg7[%c0_12, %c0_13] : memref<1x1xf32, #tpu.memory_space<vmem>>, vector<1x1xf32>
    tpu.vector_store %arg7[%c0_12, %c0_13], %26 {strides = array<i32>} : memref<1x1xf32, #tpu.memory_space<vmem>>, vector<1x1xf32>,
    %c0_14 = arith.constant 0 : index
    %c0_15 = arith.constant 0 : index
    %28 = vector.load %arg8[%c0_14, %c0_15] : memref<1x1xf32, #tpu.memory_space<vmem>>, vector<1x1xf32>
    %29 = vector.shape_cast %19 : vector<8x1xf32> to vector<1x8x1xf32>
    %cst_16 = arith.constant dense<0x7F800000> : vector<1xf32>
    %30 = vector.multi_reduction <minimumf>, %29, %cst_16 [1, 2] : vector<1x8x1xf32> to vector<1xf32>
    %31 = vector.shape_cast %30 : vector<1xf32> to vector<1x1x1xf32>
    %32 = vector.extract %31[0, 0, 0] : f32 from vector<1x1x1xf32>
    %33 = vector.broadcast %32 : f32 to vector<1x1xf32>
    %34 = arith.minimumf %28, %33 : vector<1x1xf32>
    %c0_17 = arith.constant 0 : index
    %c0_18 = arith.constant 0 : index
    %35 = vector.load %arg8[%c0_17, %c0_18] : memref<1x1xf32, #tpu.memory_space<vmem>>, vector<1x1xf32>
    tpu.vector_store %arg8[%c0_17, %c0_18], %34 {strides = array<i32>} : memref<1x1xf32, #tpu.memory_space<vmem>>, vector<1x1xf32>,
    %c0_i32_19 = arith.constant 0 : i32
    %36 = arith.cmpi eq, %arg1, %c0_i32_19 : i32
    %37 = arith.extui %36 : i1 to i32
    %c0_i32_20 = arith.constant 0 : i32
    %38 = arith.cmpi ne, %37, %c0_i32_20 : i32
    scf.if %38 {
      %c0_21 = arith.constant 0 : index
      %c0_22 = arith.constant 0 : index
      %39 = vector.load %arg7[%c0_21, %c0_22] : memref<1x1xf32, #tpu.memory_space<vmem>>, vector<1x1xf32>
      %40 = vector.shape_cast %39 : vector<1x1xf32> to vector<1x1xf32>
      %41 = vector.broadcast %40 : vector<1x1xf32> to vector<8x128xf32>
      %c0_23 = arith.constant 0 : index
      %c0_24 = arith.constant 0 : index
      %42 = vector.load %arg5[%c0_23, %c0_24] : memref<8x128xf32, #tpu.memory_space<vmem>>, vector<8x128xf32>
      tpu.vector_store %arg5[%c0_23, %c0_24], %41 {strides = array<i32>} : memref<8x128xf32, #tpu.memory_space<vmem>>, vector<8x128xf32>,
      %c0_25 = arith.constant 0 : index
      %c0_26 = arith.constant 0 : index
      %43 = vector.load %arg8[%c0_25, %c0_26] : memref<1x1xf32, #tpu.memory_space<vmem>>, vector<1x1xf32>
      %44 = vector.shape_cast %43 : vector<1x1xf32> to vector<1x1xf32>
      %45 = vector.broadcast %44 : vector<1x1xf32> to vector<8x128xf32>
      %c0_27 = arith.constant 0 : index
      %c0_28 = arith.constant 0 : index
      %46 = vector.load %arg6[%c0_27, %c0_28] : memref<8x128xf32, #tpu.memory_space<vmem>>, vector<8x128xf32>
      tpu.vector_store %arg6[%c0_27, %c0_28], %45 {strides = array<i32>} : memref<8x128xf32, #tpu.memory_space<vmem>>, vector<8x128xf32>,
    } else {
    }
    return
  }
  func.func @transform_0(%arg0: i32, %arg1: i32) -> (i32, i32) {
    %c1_i32 = arith.constant 1 : i32
    %0 = arith.muli %arg0, %c1_i32 : i32
    %1 = arith.addi %0, %arg1 : i32
    %c0_i32 = arith.constant 0 : i32
    %c0_i32_0 = arith.constant 0 : i32
    return %1, %c0_i32 : i32, i32
  }
  func.func @transform_1(%arg0: i32, %arg1: i32) -> (i32, i32) {
    %c1_i32 = arith.constant 1 : i32
    %0 = arith.muli %arg0, %c1_i32 : i32
    %1 = arith.addi %0, %arg1 : i32
    %c0_i32 = arith.constant 0 : i32
    %c0_i32_0 = arith.constant 0 : i32
    return %1, %c0_i32 : i32, i32
  }
  func.func @transform_2(%arg0: i32, %arg1: i32) -> (i32, i32) {
    %c1_i32 = arith.constant 1 : i32
    %0 = arith.muli %arg0, %c1_i32 : i32
    %1 = arith.addi %0, %arg1 : i32
    %c0_i32 = arith.constant 0 : i32
    %c0_i32_0 = arith.constant 0 : i32
    return %1, %c0_i32 : i32, i32
  }
  func.func @transform_3(%arg0: i32, %arg1: i32) -> (i32, i32) {
    %c0_i32 = arith.constant 0 : i32
    %c0_i32_0 = arith.constant 0 : i32
    return %arg0, %c0_i32 : i32, i32
  }
  func.func @transform_4(%arg0: i32, %arg1: i32) -> (i32, i32) {
    %c0_i32 = arith.constant 0 : i32
    %c0_i32_0 = arith.constant 0 : i32
    return %arg0, %c0_i32 : i32, i32
  }
}

</mosaic_0001>

<llo_original>
// kernel: tpu_custom_call.1
$region0: #{tpu_custom_call.1}
  #allocation0 [shape = 'u32[]', space=smem, size = 0x4, offset = 0x4, fixed_abs, tag = 'smem constant byte address 0x4 - core index']
  #allocation1 [shape = 'u32[144,128]{1,0:T(1,128)}', space=vmem, size = 0x12000, scoped, tag = 'internal scratch']
  #allocation2 [shape = 'f32[1,1]{1,0:T(1,128)}', space=vmem, size = 0x200, scoped, tag = 'scratch operand']
  #allocation3 [shape = 'f32[1,1]{1,0:T(1,128)}', space=vmem, size = 0x200, scoped, tag = 'scratch operand']
  %s0 = inlined_call_operand.hbm [shape: f32[8,32], index: 0, kind: input, shape index: {}]
  %s1 = inlined_call_operand.hbm [shape: f32[8,32], index: 1, kind: input, shape index: {}]
  %s2 = inlined_call_operand.hbm [shape: f32[8,32], index: 2, kind: input, shape index: {}]
  %s3 = inlined_call_operand.hbm [shape: f32[8,128], index: 3, kind: output, shape index: {0}]
  %s4 = inlined_call_operand.hbm [shape: f32[8,128], index: 4, kind: output, shape index: {1}]
  %5 = xla_tuple %s3, %s4
  %s6 = sld [smem:[#allocation0]]
  $region50: #{tpu_custom_call.1} parent=0
    _
  %s8 = ssub.s32 1, %s6
  %s9 = scalar_select 0, %s8, %s6
  $region1: #{tpu_custom_call.1} parent=0
    #allocation4 [shape = 'u8[4096]{0}', space=vmem, size = 0x1000, scoped, tag = 'input window, operand 0, single buffered']
    #allocation5 [shape = 's32[1]{0}', space=sflag, size = 0x4, scoped, tag = 'scoped memory for tpu_custom_call.1']
    #allocation6 [shape = 's32[1]{0}', space=sflag, size = 0x4, scoped, tag = 'scoped memory for tpu_custom_call.1']
    #allocation7 [shape = 'u8[4096]{0}', space=vmem, size = 0x1000, scoped, tag = 'input window, operand 1, single buffered']
    #allocation8 [shape = 's32[1]{0}', space=sflag, size = 0x4, scoped, tag = 'scoped memory for tpu_custom_call.1']
    #allocation9 [shape = 'u8[4096]{0}', space=vmem, size = 0x1000, scoped, tag = 'input window, operand 2, single buffered']
    #allocation10 [shape = 'u8[4096]{0}', space=vmem, size = 0x1000, scoped, tag = 'output window, operand 0, single buffered']
    #allocation11 [shape = 'u8[4096]{0}', space=vmem, size = 0x1000, scoped, tag = 'output window, operand 1, single buffered']
    #allocation12 [shape = 's32[1]{0}', space=sflag, size = 0x4, scoped, tag = 'scoped memory for tpu_custom_call.1']
    %10 = vsyncpa [#allocation5], 0
    %11 = vsyncpa [#allocation8], 0
    %12 = vsyncpa [#allocation6], 0
    %13 = vsyncpa [#allocation12], 0
    // Predicated region
    $region2: #{tpu_custom_call.1} parent=1 // pred_check
      _
    $region3: #{tpu_custom_call.1} parent=1 // pred_check_branch
      %15 = sbr.rel (0) target = $region5
    $region4: #{tpu_custom_call.1} parent=1 // pred_region
      %s16 = sadd.s32 0, 0
      %s18 = ssub.s32 128, 128
      %19 = vsyncadd [#allocation5], %s18
      %s20 = smul.addr %s16, 128
      %s21 = scalar_lea.hbm %s0, %s20
      %s23 = sshll.u32 [#allocation4], 4
      %s24 = int_to_ptr.vmem [resolvable:$true] %s23
      %26 = dma.hbm_to_vmem [thread:$0]  %s21, 128, %s24, [#allocation5]
    $region5: #{tpu_custom_call.1} parent=1 // pred_fallthru
      _
    // Predicated region
    $region6: #{tpu_custom_call.1} parent=1 // pred_check
      _
    $region7: #{tpu_custom_call.1} parent=1 // pred_check_branch
      %28 = sbr.rel (0) target = $region9
    $region8: #{tpu_custom_call.1} parent=1 // pred_region
      %s29 = sadd.s32 0, 0
      %s31 = ssub.s32 128, 128
      %32 = vsyncadd [#allocation8], %s31
      %s33 = smul.addr %s29, 128
      %s34 = scalar_lea.hbm %s1, %s33
      %s36 = sshll.u32 [#allocation7], 4
      %s37 = int_to_ptr.vmem [resolvable:$true] %s36
      %39 = dma.hbm_to_vmem [thread:$0]  %s34, 128, %s37, [#allocation8]
    $region9: #{tpu_custom_call.1} parent=1 // pred_fallthru
      _
    // Predicated region
    $region10: #{tpu_custom_call.1} parent=1 // pred_check
      _
    $region11: #{tpu_custom_call.1} parent=1 // pred_check_branch
      %41 = sbr.rel (0) target = $region13
    $region12: #{tpu_custom_call.1} parent=1 // pred_region
      %s42 = sadd.s32 0, 0
      %s44 = ssub.s32 128, 128
      %45 = vsyncadd [#allocation8], %s44
      %s46 = smul.addr %s42, 128
      %s47 = scalar_lea.hbm %s2, %s46
      %s49 = sshll.u32 [#allocation9], 4
      %s50 = int_to_ptr.vmem [resolvable:$true] %s49
      %52 = dma.hbm_to_vmem [thread:$0]  %s47, 128, %s50, [#allocation8]
    $region13: #{tpu_custom_call.1} parent=1 // pred_fallthru
      _
    // Predicated region
    $region14: #{tpu_custom_call.1} parent=1 // pred_check
      _
    $region15: #{tpu_custom_call.1} parent=1 // pred_check_branch
      %54 = sbr.rel (0) target = $region17
    $region16: #{tpu_custom_call.1} parent=1 // pred_region
      %55 = dma.done [#allocation5], 128
    $region17: #{tpu_custom_call.1} parent=1 // pred_fallthru
      _
    // Predicated region
    $region18: #{tpu_custom_call.1} parent=1 // pred_check
      _
    $region19: #{tpu_custom_call.1} parent=1 // pred_check_branch
      %57 = sbr.rel (0) target = $region21
    $region20: #{tpu_custom_call.1} parent=1 // pred_region
      %58 = dma.done [#allocation8], 128
    $region21: #{tpu_custom_call.1} parent=1 // pred_fallthru
      _
    // Predicated region
    $region22: #{tpu_custom_call.1} parent=1 // pred_check
      _
    $region23: #{tpu_custom_call.1} parent=1 // pred_check_branch
      %60 = sbr.rel (0) target = $region25
    $region24: #{tpu_custom_call.1} parent=1 // pred_region
      %61 = dma.done [#allocation8], 128
    $region25: #{tpu_custom_call.1} parent=1 // pred_fallthru
      _
    %s62 = sadd.s32 0, 0
    %s63 = sadd.s32 0, 0
    %s64 = sadd.s32 0, 0
    %p65 = scmp.eq.s32.totalorder 0, 0
    // Predicated region
    $region26: #{tpu_custom_call.1} parent=1 // pred_check
      %p66 = pneg %p65
    $region27: #{tpu_custom_call.1} parent=1 // pred_check_branch
      %68 = sbr.rel (%p66) target = $region29
    $region28: #{tpu_custom_call.1} parent=1 // pred_region
      %vm69 = vcmask 0
      %70 = vst.msk [vmem:[#allocation2] sm:$0x1] %vm69, -inf
      %71 = vst.msk [vmem:[#allocation3] sm:$0x1] %vm69, inf
    $region29: #{tpu_custom_call.1} parent=1 // pred_fallthru
      _
    %v72 = vld [vmem:[#allocation4] sm:$0xff]
    %v73 = vld [vmem:[#allocation7] sm:$0xff]
    %v74 = vld [vmem:[#allocation9] sm:$0xff]
    %v75 = vsub.f32 %v72, %v73
    %v76 = vadd.f32 %v75, 1e-06
    %v77 = vsub.f32 %v72, %v74
    %v78 = vadd.f32 %v77, 1e-06
    %v79 = vmul.f32 %v76, %v76
    %vm80 = vcmask 261120
    %v81 = vsel %vm80, %v79, 0.0
    %82 = vadd.xlane.f32.xlu0 %v81
    %v83 = vpop.xlane.xlu0 %82
    %v84 = vrsqrt.pop %v83
    %v85 = vmul.f32 %v83, %v84
    %vm86 = vcmp.eq.f32.partialorder %v83, inf
    %v87 = vsel %vm86, %v83, %v85
    %vm88 = vcmp.eq.f32.partialorder %v83, 0.0
    %v89 = vand.u32 %v83, 2147483648
    %v90 = vsel %vm88, %v89, %v87
    %v91 = vmul.f32 %v78, %v78
    %v92 = vsel %vm80, %v91, 0.0
    %93 = vadd.xlane.f32.xlu0 %v92
    %v94 = vpop.xlane.xlu0 %93
    %v95 = vrsqrt.pop %v94
    %v96 = vmul.f32 %v94, %v95
    %vm97 = vcmp.eq.f32.partialorder %v94, inf
    %v98 = vsel %vm97, %v94, %v96
    %vm99 = vcmp.eq.f32.partialorder %v94, 0.0
    %v100 = vand.u32 %v94, 2147483648
    %v101 = vsel %vm99, %v100, %v98
    %v102 = vld [vmem:[#allocation2] sm:$0x1]
    %v103 = vrot.slane %v90, 4
    %v104 = vmax.f32 %v90, %v103
    %v105 = vrot.slane %v104, 2
    %v106 = vmax.f32 %v104, %v105
    %v107 = vrot.slane %v106, 1
    %v108 = vmax.f32 %v106, %v107
    %s109 = vtos %v108
    %v110 = vstv %s109
    %v111 = vmax.f32 %v102, %v110
    %vm112 = vcmask 0
    %113 = vst.msk [vmem:[#allocation2] sm:$0x1] %vm112, %v111
    %v114 = vld [vmem:[#allocation3] sm:$0x1]
    %v115 = vrot.slane %v101, 4
    %v116 = vmin.f32 %v101, %v115
    %v117 = vrot.slane %v116, 2
    %v118 = vmin.f32 %v116, %v117
    %v119 = vrot.slane %v118, 1
    %v120 = vmin.f32 %v118, %v119
    %s121 = vtos %v120
    %v122 = vstv %s121
    %v123 = vmin.f32 %v114, %v122
    %124 = vst.msk [vmem:[#allocation3] sm:$0x1] %vm112, %v123
    // Predicated region
    $region30: #{tpu_custom_call.1} parent=1 // pred_check
      %p125 = pneg %p65
    $region31: #{tpu_custom_call.1} parent=1 // pred_check_branch
      %127 = sbr.rel (%p125) target = $region33
    $region32: #{tpu_custom_call.1} parent=1 // pred_region
      %v128 = vld [vmem:[#allocation2] sm:$0x1]
      %v130 = vlaneseq
      %v131 = vshrl.u32 %v130, 7
      %v132 = vsub.s32 0, %v131
      %v133 = vrot.slane %v128, %v132
      %134 = vset.pattern.permute.xlu0 0
      %135 = vperm.xlu0 %134, %v133
      %v136 = vpop.permute.xlu0 %135
      %138 = vst [vmem:[#allocation10] sm:$0xff] %v136
      %v139 = vld [vmem:[#allocation3] sm:$0x1]
      %v141 = vlaneseq
      %v142 = vshrl.u32 %v141, 7
      %v143 = vsub.s32 0, %v142
      %v144 = vrot.slane %v139, %v143
      %145 = vset.pattern.permute.xlu0 0
      %146 = vperm.xlu0 %145, %v144
      %v147 = vpop.permute.xlu0 %146
      %149 = vst [vmem:[#allocation11] sm:$0xff] %v147
    $region33: #{tpu_custom_call.1} parent=1 // pred_fallthru
      _
    // Predicated region
    $region34: #{tpu_custom_call.1} parent=1 // pred_check
      _
    $region35: #{tpu_custom_call.1} parent=1 // pred_check_branch
      %151 = sbr.rel (0) target = $region37
    $region36: #{tpu_custom_call.1} parent=1 // pred_region
      %s153 = ssub.s32 128, 128
      %154 = vsyncadd [#allocation6], %s153
      %s156 = sshll.u32 [#allocation10], 4
      %s157 = int_to_ptr.vmem [resolvable:$true] %s156
      %159 = dma.vmem_to_hbm [thread:$0]  %s157, 128, %s3, [#allocation6]
    $region37: #{tpu_custom_call.1} parent=1 // pred_fallthru
      _
    // Predicated region
    $region38: #{tpu_custom_call.1} parent=1 // pred_check
      _
    $region39: #{tpu_custom_call.1} parent=1 // pred_check_branch
      %161 = sbr.rel (0) target = $region41
    $region40: #{tpu_custom_call.1} parent=1 // pred_region
      %s163 = ssub.s32 128, 128
      %164 = vsyncadd [#allocation12], %s163
      %s166 = sshll.u32 [#allocation11], 4
      %s167 = int_to_ptr.vmem [resolvable:$true] %s166
      %169 = dma.vmem_to_hbm [thread:$0]  %s167, 128, %s4, [#allocation12]
    $region41: #{tpu_custom_call.1} parent=1 // pred_fallthru
      _
    // Predicated region
    $region42: #{tpu_custom_call.1} parent=1 // pred_check
      _
    $region43: #{tpu_custom_call.1} parent=1 // pred_check_branch
      %171 = sbr.rel (0) target = $region45
    $region44: #{tpu_custom_call.1} parent=1 // pred_region
      %172 = dma.done [#allocation6], 128
    $region45: #{tpu_custom_call.1} parent=1 // pred_fallthru
      _
    // Predicated region
    $region46: #{tpu_custom_call.1} parent=1 // pred_check
      _
    $region47: #{tpu_custom_call.1} parent=1 // pred_check_branch
      %174 = sbr.rel (0) target = $region49
    $region48: #{tpu_custom_call.1} parent=1 // pred_region
      %175 = dma.done [#allocation12], 128
    $region49: #{tpu_custom_call.1} parent=1 // pred_fallthru
      _
    %176 = vsyncpa [#allocation5], 1
    %177 = vsyncpa [#allocation8], 1
    %178 = vsyncpa [#allocation6], 1
    %179 = vsyncpa [#allocation12], 1

</llo_original>
